<compile_context>
chip_gen: v7x
topology: tpu7x:2x2x1
jax: 0.10.0
libtpu: 0.0.40
codegen_flags: <defaults>
</compile_context>

<pallas_src>
import functools

import jax
import jax.numpy as jnp
from jax.experimental import pallas as pl
from jax.experimental.pallas import tpu as pltpu

LANE = 128  # TPU lane width; pad each branch's output features to this.


def _round_up(x: int, m: int) -> int:
    return ((x + m - 1) // m) * m


def regidual_kernel(x_ref, w_ref, b_ref, o_ref):
    """One fused matmul for both branches, then split / ReLU / sum."""
    half = w_ref.shape[1] // 2  # = D_PAD (static)
    x = x_ref[...]
    # Single MXU pass over x for both Linear layers.
    h = jnp.dot(x, w_ref[...], preferred_element_type=jnp.float32) + b_ref[...]
    h1 = jnp.maximum(h[:, :half], 0.0)  # branch 1: Linear -> ReLU
    h2 = h[:, half:]                    # branch 2: Linear
    o_ref[...] = (h1 + h2).astype(o_ref.dtype)


def prepare_params(w1, b1, w2, b2):
    """One-time parameter prep (do NOT call per forward).

    PyTorch Linear stores W as [out, in]; we transpose to [in, out], zero-pad the
    output-feature axis to a multiple of 128 lanes, and concatenate the two
    branches' weights/biases along that axis so the kernel does one matmul.
    Zero padding is exact: padded columns give relu(0) + 0 = 0 and are sliced off.
    """
    d_out, d_in = w1.shape
    d_pad = _round_up(d_out, LANE)

    def pad_t(w):
        wt = jnp.zeros((d_in, d_pad), dtype=w.dtype)
        return wt.at[:, :d_out].set(w.T)

    def pad_b(b):
        bp = jnp.zeros((1, d_pad), dtype=b.dtype)
        return bp.at[0, :d_out].set(b)

    w_cat = jnp.concatenate([pad_t(w1), pad_t(w2)], axis=1)   # [D_in, 2*D_PAD]
    b_cat = jnp.concatenate([pad_b(b1), pad_b(b2)], axis=1)   # [1,    2*D_PAD]
    return w_cat, b_cat, d_out, d_pad


@functools.partial(jax.jit, static_argnames=("d_out", "d_pad"))
def regidual_forward(x, w_cat, b_cat, *, d_out: int, d_pad: int):
    """x: [B, D_in]; w_cat: [D_in, 2*d_pad]; b_cat: [1, 2*d_pad] (from prepare_params)."""
    B, D_in = x.shape

    # Batch tiling: rows padded to a multiple of the tile; tile capped at 512
    # rows so (x tile + out tile) * double buffering stays far under scoped VMEM
    # on every chip (incl. v7x's 64 MiB physical / ~32 MiB scoped per TC).
    tb = min(_round_up(B, 8), 512)
    b_pad = _round_up(B, tb)
    if b_pad != B:
        x = jnp.pad(x, ((0, b_pad - B), (0, 0)))

    grid = (b_pad // tb,)

    bytes_accessed = (
        b_pad * D_in * x.dtype.itemsize
        + w_cat.size * w_cat.dtype.itemsize
        + b_cat.size * b_cat.dtype.itemsize
        + b_pad * d_pad * x.dtype.itemsize
    )
    cost = pl.CostEstimate(
        flops=2 * b_pad * D_in * (2 * d_pad),
        transcendentals=0,
        bytes_accessed=bytes_accessed,
    )

    out = pl.pallas_call(
        regidual_kernel,
        out_shape=jax.ShapeDtypeStruct((b_pad, d_pad), x.dtype),
        grid=grid,
        in_specs=[
            pl.BlockSpec((tb, D_in), lambda i: (i, 0)),          # x tile (pipelined)
            pl.BlockSpec((D_in, 2 * d_pad), lambda i: (0, 0)),   # fused weights (resident)
            pl.BlockSpec((1, 2 * d_pad), lambda i: (0, 0)),      # fused biases (resident)
        ],
        out_specs=pl.BlockSpec((tb, d_pad), lambda i: (i, 0)),   # lane-dense output
        compiler_params=pltpu.CompilerParams(
            dimension_semantics=("parallel",),                   # megacore on v7x
        ),
        cost_estimate=cost,
    )(x, w_cat, b_cat)

    return out[:B, :d_out]


def reference_forward(x, w1, b1, w2, b2):
    h1 = jnp.maximum(x @ w1.T + b1, 0.0)
    h2 = x @ w2.T + b2
    return h1 + h2


if __name__ == "__main__":
    B, D_in, D_out = 8, 32, 32

    key = jax.random.PRNGKey(0)
    kx, kw1, kb1, kw2, kb2 = jax.random.split(key, 5)

    # Deterministic parameter init (uniform like PyTorch's default Linear init).
    bound = 1.0 / (D_in ** 0.5)
    x = jax.random.normal(kx, (B, D_in), dtype=jnp.float32)
    w1 = jax.random.uniform(kw1, (D_out, D_in), jnp.float32, -bound, bound)
    b1 = jax.random.uniform(kb1, (D_out,), jnp.float32, -bound, bound)
    w2 = jax.random.uniform(kw2, (D_out, D_in), jnp.float32, -bound, bound)
    b2 = jax.random.uniform(kb2, (D_out,), jnp.float32, -bound, bound)

    # One-time parameter preparation (transpose + pad + concat), hoisted out of
    # the forward path as the module would do at construction time.
    w_cat, b_cat, d_out, d_pad = prepare_params(w1, b1, w2, b2)
    w_cat = jax.block_until_ready(w_cat)
    b_cat = jax.block_until_ready(b_cat)

    out = regidual_forward(x, w_cat, b_cat, d_out=d_out, d_pad=d_pad)
    out = jax.block_until_ready(out)

    ref = reference_forward(x, w1, b1, w2, b2)
    assert out.shape == (B, D_out)
    assert jnp.allclose(out, ref, atol=1e-5, rtol=1e-5)

    # Also exercise the tiled-batch path (multi-step grid) for correctness.
    B_big = 1024 + 40  # non-multiple of the tile -> tests padding/slicing path
    x_big = jax.random.normal(jax.random.PRNGKey(1), (B_big, D_in), jnp.float32)
    out_big = jax.block_until_ready(
        regidual_forward(x_big, w_cat, b_cat, d_out=d_out, d_pad=d_pad)
    )
    ref_big = reference_forward(x_big, w1, b1, w2, b2)
    assert out_big.shape == (B_big, D_out)
    assert jnp.allclose(out_big, ref_big, atol=1e-5, rtol=1e-5)

    print("KERNEL_OK")
</pallas_src>

<mosaic_0001>
module attributes {stable_mosaic.version = 11 : i64} {
  func.func @regidual_kernel(%arg0: i32, %arg1: memref<8x32xf32, #tpu.memory_space<vmem>>, %arg2: memref<32x256xf32, #tpu.memory_space<vmem>>, %arg3: memref<1x256xf32, #tpu.memory_space<vmem>>, %arg4: memref<8x128xf32, #tpu.memory_space<vmem>>) attributes {dimension_semantics = [#tpu.dimension_semantics<parallel>], iteration_bounds = array<i64: 1>, scalar_prefetch = 0 : i64, scratch_operands = 0 : i64, tpu.core_type = #tpu.core_type<tc>, window_params = [{transform_indices = @transform_0, window_bounds = array<i64: 8, 32>}, {pipeline_mode = #tpu.pipeline_mode<synchronous>, transform_indices = @transform_1, window_bounds = array<i64: 32, 256>}, {pipeline_mode = #tpu.pipeline_mode<synchronous>, transform_indices = @transform_2, window_bounds = array<i64: 1, 256>}, {transform_indices = @transform_3, window_bounds = array<i64: 8, 128>}]} {
    %c0 = arith.constant 0 : index
    %c0_0 = arith.constant 0 : index
    %0 = vector.load %arg1[%c0, %c0_0] : memref<8x32xf32, #tpu.memory_space<vmem>>, vector<8x32xf32>
    %c0_1 = arith.constant 0 : index
    %c0_2 = arith.constant 0 : index
    %1 = vector.load %arg2[%c0_1, %c0_2] : memref<32x256xf32, #tpu.memory_space<vmem>>, vector<32x256xf32>
    %cst = arith.constant dense<0.000000e+00> : vector<8x256xf32>
    %2 = tpu.matmul %0, %1, %cst {dimension_numbers = #tpu.dot_dimension_numbers<[1], [0], [0], [1], [0, 0, 1, 1], [], []>} : vector<8x32xf32>, vector<32x256xf32>, vector<8x256xf32> -> vector<8x256xf32>
    %c0_3 = arith.constant 0 : index
    %c0_4 = arith.constant 0 : index
    %3 = vector.load %arg3[%c0_3, %c0_4] : memref<1x256xf32, #tpu.memory_space<vmem>>, vector<1x256xf32>
    %4 = vector.broadcast %3 : vector<1x256xf32> to vector<8x256xf32>
    %5 = arith.addf %2, %4 : vector<8x256xf32>
    %6 = vector.extract_strided_slice %5 {offsets = [0, 0], sizes = [8, 128], strides = [1, 1]} : vector<8x256xf32> to vector<8x128xf32>
    %cst_5 = arith.constant 0.000000e+00 : f32
    %7 = vector.broadcast %cst_5 : f32 to vector<8x128xf32>
    %8 = arith.maximumf %6, %7 : vector<8x128xf32>
    %9 = vector.extract_strided_slice %5 {offsets = [0, 128], sizes = [8, 128], strides = [1, 1]} : vector<8x256xf32> to vector<8x128xf32>
    %10 = arith.addf %8, %9 : vector<8x128xf32>
    %c0_6 = arith.constant 0 : index
    %c0_7 = arith.constant 0 : index
    %11 = vector.load %arg4[%c0_6, %c0_7] : memref<8x128xf32, #tpu.memory_space<vmem>>, vector<8x128xf32>
    tpu.vector_store %arg4[%c0_6, %c0_7], %10 {strides = array<i32>} : memref<8x128xf32, #tpu.memory_space<vmem>>, vector<8x128xf32>,
    return
  }
  func.func @transform_0(%arg0: i32) -> (i32, i32) {
    %c0_i32 = arith.constant 0 : i32
    %c0_i32_0 = arith.constant 0 : i32
    return %arg0, %c0_i32 : i32, i32
  }
  func.func @transform_1(%arg0: i32) -> (i32, i32) {
    %c0_i32 = arith.constant 0 : i32
    %c0_i32_0 = arith.constant 0 : i32
    %c0_i32_1 = arith.constant 0 : i32
    return %c0_i32, %c0_i32_0 : i32, i32
  }
  func.func @transform_2(%arg0: i32) -> (i32, i32) {
    %c0_i32 = arith.constant 0 : i32
    %c0_i32_0 = arith.constant 0 : i32
    %c0_i32_1 = arith.constant 0 : i32
    return %c0_i32, %c0_i32_0 : i32, i32
  }
  func.func @transform_3(%arg0: i32) -> (i32, i32) {
    %c0_i32 = arith.constant 0 : i32
    %c0_i32_0 = arith.constant 0 : i32
    return %arg0, %c0_i32 : i32, i32
  }
}

</mosaic_0001>

<llo_original>
// kernel: regidual_forward.1
$region0: #{regidual_forward.1}
  #allocation0 [shape = 'u32[]', space=smem, size = 0x4, offset = 0x4, fixed_abs, tag = 'smem constant byte address 0x4 - core index']
  #allocation1 [shape = 'u32[144,128]{1,0:T(1,128)}', space=vmem, size = 0x12000, scoped, tag = 'internal scratch']
  %s0 = inlined_call_operand.hbm [shape: f32[8,32], index: 0, kind: input, shape index: {}]
  %s1 = inlined_call_operand.hbm [shape: f32[32,256], index: 1, kind: input, shape index: {}]
  %s2 = inlined_call_operand.vmem [shape: f32[1,256], index: 2, kind: input, shape index: {}]
  %s3 = inlined_call_operand.hbm [shape: f32[8,128], index: 3, kind: output, shape index: {}]
  %s4 = sld [smem:[#allocation0]]
  $region30: #{regidual_forward.1} parent=0
    _
  %s6 = ssub.s32 1, %s4
  %s7 = scalar_select 0, %s6, %s4
  $region1: #{regidual_forward.1} parent=0
    #allocation2 [shape = 'u8[4096]{0}', space=vmem, size = 0x1000, scoped, tag = 'input window, operand 0, single buffered']
    #allocation3 [shape = 's32[1]{0}', space=sflag, size = 0x4, scoped, tag = 'scoped memory for regidual_forward.1']
    #allocation4 [shape = 's32[1]{0}', space=sflag, size = 0x4, scoped, tag = 'scoped memory for regidual_forward.1']
    #allocation5 [shape = 'u8[32768]{0}', space=vmem, size = 0x8000, scoped, tag = 'input window, operand 1, single buffered']
    #allocation6 [shape = 's32[1]{0}', space=sflag, size = 0x4, scoped, tag = 'scoped memory for regidual_forward.1']
    #allocation7 [shape = 'u8[4096]{0}', space=vmem, size = 0x1000, scoped, tag = 'output window, operand 0, single buffered']
    %8 = vsyncpa [#allocation3], 0
    %9 = vsyncpa [#allocation6], 0
    %10 = vsyncpa [#allocation4], 0
    // Predicated region
    $region2: #{regidual_forward.1} parent=1 // pred_check
      _
    $region3: #{regidual_forward.1} parent=1 // pred_check_branch
      %12 = sbr.rel (0) target = $region5
    $region4: #{regidual_forward.1} parent=1 // pred_region
      %s14 = ssub.s32 128, 128
      %15 = vsyncadd [#allocation3], %s14
      %s17 = sshll.u32 [#allocation2], 4
      %s18 = int_to_ptr.vmem [resolvable:$true] %s17
      %20 = dma.hbm_to_vmem [thread:$0]  %s0, 128, %s18, [#allocation3]
    $region5: #{regidual_forward.1} parent=1 // pred_fallthru
      _
    // Predicated region
    $region6: #{regidual_forward.1} parent=1 // pred_check
      _
    $region7: #{regidual_forward.1} parent=1 // pred_check_branch
      %22 = sbr.rel (0) target = $region9
    $region8: #{regidual_forward.1} parent=1 // pred_region
      %s24 = ssub.s32 1024, 1024
      %25 = vsyncadd [#allocation6], %s24
      %s26 = sshll.u32 [#allocation5], 4
      %s27 = int_to_ptr.vmem [resolvable:$true] %s26
      %32 = dma.hbm_to_vmem [thread:$0]  %s1, 1024, %s27, [#allocation6], 256, 256, 16
    $region9: #{regidual_forward.1} parent=1 // pred_fallthru
      _
    // Predicated region
    $region10: #{regidual_forward.1} parent=1 // pred_check
      _
    $region11: #{regidual_forward.1} parent=1 // pred_check_branch
      %34 = sbr.rel (0) target = $region13
    $region12: #{regidual_forward.1} parent=1 // pred_region
      _
    $region13: #{regidual_forward.1} parent=1 // pred_fallthru
      _
    // Predicated region
    $region14: #{regidual_forward.1} parent=1 // pred_check
      _
    $region15: #{regidual_forward.1} parent=1 // pred_check_branch
      %36 = sbr.rel (0) target = $region17
    $region16: #{regidual_forward.1} parent=1 // pred_region
      %37 = dma.done [#allocation3], 128
    $region17: #{regidual_forward.1} parent=1 // pred_fallthru
      _
    // Predicated region
    $region18: #{regidual_forward.1} parent=1 // pred_check
      _
    $region19: #{regidual_forward.1} parent=1 // pred_check_branch
      %39 = sbr.rel (0) target = $region21
    $region20: #{regidual_forward.1} parent=1 // pred_region
      %40 = dma.done [#allocation6], 1024
    $region21: #{regidual_forward.1} parent=1 // pred_fallthru
      _
    %v41 = vld [vmem:[#allocation2] sm:$0xff]
    %v42 = vld [vmem:[#allocation5] sm:$0xff]
    %v43 = vld [vmem:[#allocation5 + $0x8] sm:$0xff]
    %v44 = vld [vmem:[#allocation5 + $0x10] sm:$0xff]
    %v45 = vld [vmem:[#allocation5 + $0x18] sm:$0xff]
    %v46 = vld [vmem:[#allocation5 + $0x20] sm:$0xff]
    %v47 = vld [vmem:[#allocation5 + $0x28] sm:$0xff]
    %v48 = vld [vmem:[#allocation5 + $0x30] sm:$0xff]
    %v49 = vld [vmem:[#allocation5 + $0x38] sm:$0xff]
    %v50 = vld [vmem:[%s2] sm:$0x3]
    %v52 = vlaneseq
    %v53 = vshrl.u32 %v52, 7
    %v54 = vsub.s32 0, %v53
    %v55 = vrot.slane %v50, %v54
    %v56 = vlaneseq
    %v57 = vshrl.u32 %v56, 7
    %v58 = vsub.s32 1, %v57
    %v59 = vrot.slane %v50, %v58
    %vm62 = vcmask 261120
    %v64 = vsel %vm62, %v41, 0
    %66 = vmatprep.subr.mxu0 %v43
    %67 = vmatpush1.msra.mxu0 %v42
    %68 = vmatprep.subr.mxu0 %v45
    %69 = vmatpush1.msra.mxu0 %v44
    %70 = vmatprep.subr.mxu0 %v47
    %71 = vmatpush1.msra.mxu0 %v46
    %72 = vmatprep.subr.mxu0 %v49
    %73 = vmatpush1.msra.mxu0 %v48
    %74 = vmatprep.subr.mxu0 0.0
    %75 = vmatpush1.msra.mxu0 0.0
    %76 = vmatprep.subr.mxu0 0.0
    %77 = vmatpush1.msra.mxu0 0.0
    %78 = vmatprep.subr.mxu0 0.0
    %79 = vmatpush1.msra.mxu0 0.0
    %80 = vmatprep.subr.mxu0 0.0
    %81 = vmatpush1.msra.mxu0 0.0
    %82 = vmatprep.subr.mxu0 0.0
    %83 = vmatpush1.msra.mxu0 0.0
    %84 = vmatprep.subr.mxu0 0.0
    %85 = vmatpush1.msra.mxu0 0.0
    %86 = vmatprep.subr.mxu0 0.0
    %87 = vmatpush1.msra.mxu0 0.0
    %88 = vmatprep.subr.mxu0 0.0
    %89 = vmatpush1.msra.mxu0 0.0
    %90 = vmatprep.subr.mxu0 0.0
    %91 = vmatpush1.msra.mxu0 0.0
    %92 = vmatprep.subr.mxu0 0.0
    %93 = vmatpush1.msra.mxu0 0.0
    %94 = vmatprep.subr.mxu0 0.0
    %95 = vmatpush1.msra.mxu0 0.0
    %96 = vmatprep.subr.mxu0 0.0
    %97 = vmatpush1.msra.mxu0 0.0
    %98 = vmatprep.subr.mxu0 0.0
    %99 = vmatpush1.msra.mxu0 0.0
    %100 = vmatprep.subr.mxu0 0.0
    %101 = vmatpush1.msra.mxu0 0.0
    %102 = vmatprep.subr.mxu0 0.0
    %103 = vmatpush1.msra.mxu0 0.0
    %104 = vmatprep.subr.mxu0 0.0
    %105 = vmatpush1.msra.mxu0 0.0
    %106 = vmatprep.subr.mxu0 0.0
    %107 = vmatpush1.msra.mxu0 0.0
    %108 = vmatprep.subr.mxu0 0.0
    %109 = vmatpush1.msra.mxu0 0.0
    %110 = vmatprep.subr.mxu0 0.0
    %111 = vmatpush1.msra.mxu0 0.0
    %112 = vmatprep.subr.mxu0 0.0
    %113 = vmatpush1.msra.mxu0 0.0
    %114 = vmatprep.subr.mxu0 0.0
    %115 = vmatpush1.msra.mxu0 0.0
    %116 = vmatprep.subr.mxu0 0.0
    %117 = vmatpush1.msra.mxu0 0.0
    %118 = vmatprep.subr.mxu0 0.0
    %119 = vmatpush1.msra.mxu0 0.0
    %120 = vmatprep.subr.mxu0 0.0
    %121 = vmatpush1.msra.mxu0 0.0
    %122 = vmatprep.subr.mxu0 0.0
    %123 = vmatpush1.msra.mxu0 0.0
    %124 = vmatprep.subr.mxu0 0.0
    %125 = vmatpush1.msra.mxu0 0.0
    %126 = vmatprep.subr.mxu0 0.0
    %127 = vmatpush1.msra.mxu0 0.0
    %128 = vmatprep.subr.mxu0 0.0
    %129 = vmatpush1.msra.mxu0 0.0
    %130 = vmatprep.mubr.f32.mxu0 0.0
    %131 = vmatmul.mubr.f32.gmra.mrb[0].mxu0 %v64
    %v132 = vpop.f32.mrb[0].mxu0
    %v133 = vadd.f32 %v55, %v132
    %v134 = vpop.f32.mrb[0].mxu0
    %v135 = vadd.f32 %v59, %v134
    %136 = vdwg.mxu0
    %v137 = vmax.f32 %v133, 0.0
    %v138 = vadd.f32 %v137, %v135
    %139 = vst [vmem:[#allocation7] sm:$0xff] %v138
    // Predicated region
    $region22: #{regidual_forward.1} parent=1 // pred_check
      _
    $region23: #{regidual_forward.1} parent=1 // pred_check_branch
      %141 = sbr.rel (0) target = $region25
    $region24: #{regidual_forward.1} parent=1 // pred_region
      %s143 = ssub.s32 128, 128
      %144 = vsyncadd [#allocation4], %s143
      %s146 = sshll.u32 [#allocation7], 4
      %s147 = int_to_ptr.vmem [resolvable:$true] %s146
      %149 = dma.vmem_to_hbm [thread:$0]  %s147, 128, %s3, [#allocation4]
    $region25: #{regidual_forward.1} parent=1 // pred_fallthru
      _
    // Predicated region
    $region26: #{regidual_forward.1} parent=1 // pred_check
      _
    $region27: #{regidual_forward.1} parent=1 // pred_check_branch
      %151 = sbr.rel (0) target = $region29
    $region28: #{regidual_forward.1} parent=1 // pred_region
      %152 = dma.done [#allocation4], 128
    $region29: #{regidual_forward.1} parent=1 // pred_fallthru
      _
    %153 = vsyncpa [#allocation3], 1
    %154 = vsyncpa [#allocation6], 1
    %155 = vsyncpa [#allocation4], 1

</llo_original>
